<compile_context>
chip_gen: v5e
topology: v5e:2x2
jax: 0.10.0
libtpu: 0.0.40
codegen_flags: <defaults>
</compile_context>

<pallas_src>
import numpy as np

import jax
import jax.numpy as jnp
from jax.experimental import pallas as pl
from jax.experimental.pallas import tpu as pltpu


def _conv_out_size(n, k, s, d):
    return (n - d * (k - 1) - 1) // s + 1


def _round_up(x, m):
    return -(-x // m) * m


def _pick_batch_tile(batch):
    """Prefer >=2 sublane-aligned grid steps (v7x megacore); else one step over the batch."""
    for tb in (32, 24, 16, 8):
        if batch % tb == 0 and batch // tb >= 2:
            return tb
    for tb in (32, 24, 16, 8):
        if batch % tb == 0:
            return tb
    return batch


def build_fused_convnet_forward(in_shape, params, compute_dtype=jnp.bfloat16):
    """Builds a single-pallas_call forward for ConvNet.

    in_shape: (B, H, W, C) of the NHWC input handed to forward().
    params:
      conv : list of {'w': (Cout, Cin, KH, KW), 'b': (Cout,), 'stride': int,
                      'dilation': (dh, dw)}    # padding must be 0 (as in the example spec)
      dense: list of {'w': (n_in, n_out), 'b': (n_out,)}; the first dense weight's rows are
             in PyTorch's NCHW-flatten order (what x.view(-1, conv_out_dim) sees)
      tails: list of {'w': (tail_in, out_d), 'b': (out_d,)}
    Returns forward(x_nhwc) -> tail output (or list of tail outputs).
    """
    B, H, W, C = (int(v) for v in in_shape)
    cdt = compute_dtype
    TB = _pick_batch_tile(B)
    num_tiles = B // TB

    arrays = []

    def add(a, dtype):
        arrays.append(jnp.asarray(np.asarray(a), dtype=dtype))
        return len(arrays) - 1

    scratch_shapes = []

    def add_scratch(shape, dtype):
        scratch_shapes.append(pltpu.VMEM(shape, dtype))
        return len(scratch_shapes) - 1

    # ---------------- conv stack: pre-expand weights on the host ---------------- #
    conv_stages = []
    h_in, w_in, c_in = H, W, C
    stride_in = H          # per-image row stride inside the batch-stacked activation
    for layer in params["conv"]:
        assert int(layer.get("padding", 0)) == 0, "only padding=0 (VALID) convs supported"
        w = np.asarray(layer["w"], np.float32)            # (Cout, Cin, KH, KW)
        b = np.asarray(layer["b"], np.float32)
        c_out, c_in_w, kh_sz, kw_sz = w.shape
        assert c_in_w == c_in
        s = int(layer["stride"])
        dh, dw = (int(v) for v in layer["dilation"])
        h_out = _conv_out_size(h_in, kh_sz, s, dh)
        w_out = _conv_out_size(w_in, kw_sz, s, dw)
        wc_in = w_in * c_in
        woc = w_out * c_out
        kblk = _round_up(wc_in, 128)                      # lane-aligned per-kh K block
        rout = _round_up(h_out, 8)                        # sublane-aligned per-image rows

        # Stacked width-Toeplitz: rows (kh, wi, ci) with each kh block padded to kblk
        # (pad rows are zero), cols (wo, co):
        #   M[kh*kblk + wi*Cin + ci, wo*Cout + co] = w[co, ci, kh, kw], wi = wo*s + kw*dw
        w_khkw = np.transpose(w, (2, 3, 1, 0))            # (KH, KW, Cin, Cout)
        m_st = np.zeros((kh_sz * kblk, woc), np.float32)
        for kh in range(kh_sz):
            for kw in range(kw_sz):
                for wo in range(w_out):
                    wi = wo * s + kw * dw
                    m_st[kh * kblk + wi * c_in: kh * kblk + (wi + 1) * c_in,
                         wo * c_out: (wo + 1) * c_out] += w_khkw[kh, kw]
        brow = np.tile(b, w_out)[None, :]                 # (1, Wout*Cout), lanes (wo, co)

        conv_stages.append(dict(
            KH=kh_sz, s=s, dh=dh, Hin=h_in, Hout=h_out, WCin=wc_in, WoutC=woc,
            Kblk=kblk, Rout=rout, stride_in=stride_in,
            M=add(m_st, cdt), b=add(brow, jnp.float32),
            lhs=add_scratch((TB * rout, kh_sz * kblk), jnp.float32),
            act=add_scratch((TB * rout, woc), jnp.float32)))
        h_in, w_in, c_in = h_out, w_out, c_out
        stride_in = rout

    conv_out_dim = c_in * h_in * w_in
    Hl, WlCl, R_last = h_in, w_in * c_in, stride_in
    nconv = len(conv_stages)

    # --------------- fully connected stages: dense layers + fused tails --------------- #
    out_dims = [int(np.asarray(t["w"]).shape[1]) for t in params["tails"]]
    n_tail = sum(out_dims)
    n_tail_pad = _round_up(n_tail, 128)                   # lane-dense output stores
    wt = np.concatenate([np.asarray(t["w"], np.float32) for t in params["tails"]], axis=1)
    bt = np.concatenate([np.asarray(t["b"], np.float32) for t in params["tails"]], axis=0)
    wt = np.pad(wt, ((0, 0), (0, n_tail_pad - n_tail)))
    bt = np.pad(bt, (0, n_tail_pad - n_tail))[None, :]

    fc_list = [(np.asarray(d["w"], np.float32), np.asarray(d["b"], np.float32)[None, :], True)
               for d in params["dense"]]
    fc_list.append((wt, bt, False))                       # fused model_tails, no ReLU

    fc_stages = []
    for i, (wf, bf, relu) in enumerate(fc_list):
        if i == 0:
            # First FC consumes the conv map.  PyTorch flattens NCHW; our lanes are (w, c)
            # per image row -> permute weight rows (c, h, w) -> (h, w, c) once on the host.
            n_out = wf.shape[1]
            assert wf.shape[0] == conv_out_dim
            wf = (wf.reshape(c_in, Hl, w_in, n_out)
                    .transpose(1, 2, 0, 3).reshape(conv_out_dim, n_out))
        fc_stages.append(dict(W=add(wf, cdt), b=add(bf, jnp.float32), relu=relu,
                              last=(i == len(fc_list) - 1)))

    n_arr = len(arrays)

    # --------------------------------- fused kernel --------------------------------- #
    def kernel(*refs):
        x_ref = refs[0]
        wref = refs[1:1 + n_arr]
        o_ref = refs[1 + n_arr]
        scratch = refs[2 + n_arr:]

        # conv stack: one (TB*Rout, KH*Kblk) @ (KH*Kblk, Wout*Cout) MXU matmul per layer
        src, src_stride = x_ref, H
        for st in conv_stages:
            lhs_ref, act_ref = scratch[st["lhs"]], scratch[st["act"]]
            Hout, KH, s, dh = st["Hout"], st["KH"], st["s"], st["dh"]
            # zero pad rows / pad lanes of the im2col slab (keeps the dot NaN-free)
            lhs_ref[...] = jnp.zeros(lhs_ref.shape, jnp.float32)
            for bi in range(TB):
                for kh in range(KH):
                    start = bi * src_stride + kh * dh
                    if s == 1:
                        win = src[pl.ds(start, Hout), :]
                    else:
                        win = src[pl.ds(start, Hout, stride=s), :]     # strided row window
                    lhs_ref[pl.ds(bi * st["Rout"], Hout),
                            pl.ds(kh * st["Kblk"], st["WCin"])] = win  # (8,128)-aligned dst
            acc = jnp.dot(lhs_ref[...].astype(cdt), wref[st["M"]][...],
                          preferred_element_type=jnp.float32)
            act_ref[...] = jnp.maximum(acc + wref[st["b"]][...], 0.0)  # f32 bias + ReLU
            src, src_stride = act_ref, st["Rout"]

        # dense stack + fused model_tails.  First FC gathers each conv-map row across all
        # TB images with ONE strided load (batch-stacked M) and accumulates Hl dots.
        h = None
        for i, st in enumerate(fc_stages):
            w_ref, b_ref = wref[st["W"]], wref[st["b"]]
            if i == 0:
                acc = jnp.zeros((TB, w_ref.shape[1]), jnp.float32)
                for r in range(Hl):
                    slab = src[pl.ds(r, TB, stride=R_last), :]         # (TB, Wl*Cl)
                    acc = acc + jnp.dot(slab.astype(cdt),
                                        w_ref[pl.ds(r * WlCl, WlCl), :],
                                        preferred_element_type=jnp.float32)
            else:
                acc = jnp.dot(h.astype(cdt), w_ref[...],
                              preferred_element_type=jnp.float32)
            acc = acc + b_ref[...]
            h = jnp.maximum(acc, 0.0) if st["relu"] else acc

        o_ref[...] = h.astype(o_ref.dtype)                 # (TB, n_tail_pad): lane-dense

    in_specs = [pl.BlockSpec((TB * H, W * C), lambda t: (t, 0))]
    for arr in arrays:
        in_specs.append(pl.BlockSpec(arr.shape, (lambda nd: (lambda t: (0,) * nd))(arr.ndim)))

    fused = pl.pallas_call(
        kernel,
        out_shape=jax.ShapeDtypeStruct((B, n_tail_pad), jnp.float32),
        grid=(num_tiles,),
        in_specs=in_specs,
        out_specs=pl.BlockSpec((TB, n_tail_pad), lambda t: (t, 0)),
        scratch_shapes=scratch_shapes,
        compiler_params=pltpu.CompilerParams(
            dimension_semantics=("parallel",),
            vmem_limit_bytes=32 * 1024 * 1024),
    )

    offsets = np.cumsum([0] + out_dims)

    @jax.jit
    def forward(x_nhwc):
        # NHWC -> (B*H, W*C) is a free contiguous reshape; the bf16 cast happens in-kernel.
        xb = x_nhwc.reshape(B * H, W * C)
        y = fused(xb, *arrays)
        outs = [y[:, int(offsets[i]):int(offsets[i + 1])] for i in range(len(out_dims))]
        return outs[0] if len(outs) == 1 else outs

    return forward


# --------------------- plain-JAX f32 reference (for sanity check) --------------------- #
def reference_forward(x_nhwc, params):
    """Mirrors ConvNet.forward (PyTorch semantics) in plain JAX, f32 end-to-end."""
    y = x_nhwc
    for layer in params["conv"]:
        s = int(layer["stride"])
        dh, dw = layer["dilation"]
        y = jax.lax.conv_general_dilated(
            y, layer["w"], window_strides=(s, s), padding="VALID",
            rhs_dilation=(dh, dw), dimension_numbers=("NHWC", "OIHW", "NHWC"))
        y = jnp.maximum(y + layer["b"][None, None, None, :], 0.0)
    bsz = y.shape[0]
    flat = jnp.transpose(y, (0, 3, 1, 2)).reshape(bsz, -1)  # x.view(-1, conv_out_dim) on NCHW
    h = flat
    for d in params["dense"]:
        h = jnp.maximum(h @ d["w"] + d["b"], 0.0)
    outs = [h @ t["w"] + t["b"] for t in params["tails"]]
    return outs[0] if len(outs) == 1 else outs


# ----------------------------------------- main ----------------------------------------- #
if __name__ == "__main__":
    key = jax.random.PRNGKey(0)

    # Small shapes consistent with the module (ConvNet over an NHWC image input).
    B, H, W, C = 2, 16, 16, 4
    conv_spec = [
        # (in_ch, out_ch, (KH, KW), stride, pad, (dil_h, dil_w))  -- net_spec hid_layers[0]
        (4, 8, (4, 4), 2, 0, (1, 1)),
        (8, 16, (3, 3), 1, 0, (1, 1)),
    ]
    dense_spec = [32]     # net_spec hid_layers[1]
    out_dims = [6]

    n_keys = 2 * (len(conv_spec) + len(dense_spec) + len(out_dims)) + 1
    keys = iter(jax.random.split(key, n_keys))
    params = {"conv": [], "dense": [], "tails": []}

    h_cur, w_cur, c_cur = H, W, C
    for (cin, cout, k, s, p, d) in conv_spec:
        assert cin == c_cur and p == 0   # padding=0, as in the reference net_spec example
        wgt = jax.random.normal(next(keys), (cout, cin, k[0], k[1]), jnp.float32) * 0.1
        bia = jax.random.normal(next(keys), (cout,), jnp.float32) * 0.01
        params["conv"].append({"w": wgt, "b": bia, "stride": s, "padding": p, "dilation": d})
        h_cur = _conv_out_size(h_cur, k[0], s, d[0])
        w_cur = _conv_out_size(w_cur, k[1], s, d[1])
        c_cur = cout
    conv_out_dim = c_cur * h_cur * w_cur            # 16 * 5 * 5 = 400

    dims = [conv_out_dim] + dense_spec
    for i in range(len(dense_spec)):
        wgt = jax.random.normal(next(keys), (dims[i], dims[i + 1]), jnp.float32) * 0.05
        bia = jax.random.normal(next(keys), (dims[i + 1],), jnp.float32) * 0.01
        params["dense"].append({"w": wgt, "b": bia})

    tail_in = dense_spec[-1] if dense_spec else conv_out_dim
    for od in out_dims:
        wgt = jax.random.normal(next(keys), (tail_in, od), jnp.float32) * 0.05
        bia = jax.random.normal(next(keys), (od,), jnp.float32) * 0.01
        params["tails"].append({"w": wgt, "b": bia})

    x = jax.random.normal(next(keys), (B, H, W, C), jnp.float32)   # NHWC, as fed to forward()

    forward = build_fused_convnet_forward((B, H, W, C), params)
    out = forward(x)
    jax.block_until_ready(out)
    assert out.shape == (B, out_dims[0]), out.shape

    # sanity check vs. the f32 reference (kernel uses bf16 matmul operands / f32 accumulation)
    ref = reference_forward(x, params)
    diff = float(jnp.max(jnp.abs(out - ref)))
    scale = float(jnp.max(jnp.abs(ref)))
    assert diff <= 2e-2 + 2e-2 * scale, ("numerical mismatch vs reference", diff, scale)

    print("KERNEL_OK")
</pallas_src>

<mosaic_0001>
module attributes {stable_mosaic.version = 11 : i64} {
  func.func @kernel(%arg0: i32, %arg1: memref<32x64xf32, #tpu.memory_space<vmem>>, %arg2: memref<512x56xbf16, #tpu.memory_space<vmem>>, %arg3: memref<1x56xf32, #tpu.memory_space<vmem>>, %arg4: memref<384x80xbf16, #tpu.memory_space<vmem>>, %arg5: memref<1x80xf32, #tpu.memory_space<vmem>>, %arg6: memref<400x32xbf16, #tpu.memory_space<vmem>>, %arg7: memref<1x32xf32, #tpu.memory_space<vmem>>, %arg8: memref<32x128xbf16, #tpu.memory_space<vmem>>, %arg9: memref<1x128xf32, #tpu.memory_space<vmem>>, %arg10: memref<2x128xf32, #tpu.memory_space<vmem>>, %arg11: memref<16x512xf32, #tpu.memory_space<vmem>>, %arg12: memref<16x56xf32, #tpu.memory_space<vmem>>, %arg13: memref<16x384xf32, #tpu.memory_space<vmem>>, %arg14: memref<16x80xf32, #tpu.memory_space<vmem>>) attributes {dimension_semantics = [#tpu.dimension_semantics<parallel>], iteration_bounds = array<i64: 1>, scalar_prefetch = 0 : i64, scratch_operands = 4 : i64, tpu.core_type = #tpu.core_type<tc>, window_params = [{transform_indices = @transform_0, window_bounds = array<i64: 32, 64>}, {pipeline_mode = #tpu.pipeline_mode<synchronous>, transform_indices = @transform_1, window_bounds = array<i64: 512, 56>}, {pipeline_mode = #tpu.pipeline_mode<synchronous>, transform_indices = @transform_2, window_bounds = array<i64: 1, 56>}, {pipeline_mode = #tpu.pipeline_mode<synchronous>, transform_indices = @transform_3, window_bounds = array<i64: 384, 80>}, {pipeline_mode = #tpu.pipeline_mode<synchronous>, transform_indices = @transform_4, window_bounds = array<i64: 1, 80>}, {pipeline_mode = #tpu.pipeline_mode<synchronous>, transform_indices = @transform_5, window_bounds = array<i64: 400, 32>}, {pipeline_mode = #tpu.pipeline_mode<synchronous>, transform_indices = @transform_6, window_bounds = array<i64: 1, 32>}, {pipeline_mode = #tpu.pipeline_mode<synchronous>, transform_indices = @transform_7, window_bounds = array<i64: 32, 128>}, {pipeline_mode = #tpu.pipeline_mode<synchronous>, transform_indices = @transform_8, window_bounds = array<i64: 1, 128>}, {transform_indices = @transform_9, window_bounds = array<i64: 2, 128>}]} {
    %cst = arith.constant 0.000000e+00 : f32
    %0 = vector.broadcast %cst : f32 to vector<16x512xf32>
    %c0 = arith.constant 0 : index
    %c0_0 = arith.constant 0 : index
    %1 = vector.load %arg11[%c0, %c0_0] : memref<16x512xf32, #tpu.memory_space<vmem>>, vector<16x512xf32>
    tpu.vector_store %arg11[%c0, %c0_0], %0 {strides = array<i32>} : memref<16x512xf32, #tpu.memory_space<vmem>>, vector<16x512xf32>,
    %c0_1 = arith.constant 0 : index
    %c0_2 = arith.constant 0 : index
    %2 = tpu.strided_load %arg1[%c0_1, %c0_2] {strides = array<i32: 2, 1>} : memref<32x64xf32, #tpu.memory_space<vmem>>, vector<7x64xf32>
    %c0_3 = arith.constant 0 : index
    %c0_4 = arith.constant 0 : index
    %3 = vector.load %arg11[%c0_3, %c0_4] : memref<16x512xf32, #tpu.memory_space<vmem>>, vector<7x64xf32>
    tpu.vector_store %arg11[%c0_3, %c0_4], %2 {strides = array<i32>} : memref<16x512xf32, #tpu.memory_space<vmem>>, vector<7x64xf32>,
    %c1 = arith.constant 1 : index
    %c0_5 = arith.constant 0 : index
    %4 = tpu.strided_load %arg1[%c1, %c0_5] {strides = array<i32: 2, 1>} : memref<32x64xf32, #tpu.memory_space<vmem>>, vector<7x64xf32>
    %c0_6 = arith.constant 0 : index
    %c128 = arith.constant 128 : index
    %5 = vector.load %arg11[%c0_6, %c128] : memref<16x512xf32, #tpu.memory_space<vmem>>, vector<7x64xf32>
    tpu.vector_store %arg11[%c0_6, %c128], %4 {strides = array<i32>} : memref<16x512xf32, #tpu.memory_space<vmem>>, vector<7x64xf32>,
    %c2 = arith.constant 2 : index
    %c0_7 = arith.constant 0 : index
    %6 = tpu.strided_load %arg1[%c2, %c0_7] {strides = array<i32: 2, 1>} : memref<32x64xf32, #tpu.memory_space<vmem>>, vector<7x64xf32>
    %c0_8 = arith.constant 0 : index
    %c256 = arith.constant 256 : index
    %7 = vector.load %arg11[%c0_8, %c256] : memref<16x512xf32, #tpu.memory_space<vmem>>, vector<7x64xf32>
    tpu.vector_store %arg11[%c0_8, %c256], %6 {strides = array<i32>} : memref<16x512xf32, #tpu.memory_space<vmem>>, vector<7x64xf32>,
    %c3 = arith.constant 3 : index
    %c0_9 = arith.constant 0 : index
    %8 = tpu.strided_load %arg1[%c3, %c0_9] {strides = array<i32: 2, 1>} : memref<32x64xf32, #tpu.memory_space<vmem>>, vector<7x64xf32>
    %c0_10 = arith.constant 0 : index
    %c384 = arith.constant 384 : index
    %9 = vector.load %arg11[%c0_10, %c384] : memref<16x512xf32, #tpu.memory_space<vmem>>, vector<7x64xf32>
    tpu.vector_store %arg11[%c0_10, %c384], %8 {strides = array<i32>} : memref<16x512xf32, #tpu.memory_space<vmem>>, vector<7x64xf32>,
    %c16 = arith.constant 16 : index
    %c0_11 = arith.constant 0 : index
    %10 = tpu.strided_load %arg1[%c16, %c0_11] {strides = array<i32: 2, 1>} : memref<32x64xf32, #tpu.memory_space<vmem>>, vector<7x64xf32>
    %c8 = arith.constant 8 : index
    %c0_12 = arith.constant 0 : index
    %11 = vector.load %arg11[%c8, %c0_12] : memref<16x512xf32, #tpu.memory_space<vmem>>, vector<7x64xf32>
    tpu.vector_store %arg11[%c8, %c0_12], %10 {strides = array<i32>} : memref<16x512xf32, #tpu.memory_space<vmem>>, vector<7x64xf32>,
    %c17 = arith.constant 17 : index
    %c0_13 = arith.constant 0 : index
    %12 = tpu.strided_load %arg1[%c17, %c0_13] {strides = array<i32: 2, 1>} : memref<32x64xf32, #tpu.memory_space<vmem>>, vector<7x64xf32>
    %c8_14 = arith.constant 8 : index
    %c128_15 = arith.constant 128 : index
    %13 = vector.load %arg11[%c8_14, %c128_15] : memref<16x512xf32, #tpu.memory_space<vmem>>, vector<7x64xf32>
    tpu.vector_store %arg11[%c8_14, %c128_15], %12 {strides = array<i32>} : memref<16x512xf32, #tpu.memory_space<vmem>>, vector<7x64xf32>,
    %c18 = arith.constant 18 : index
    %c0_16 = arith.constant 0 : index
    %14 = tpu.strided_load %arg1[%c18, %c0_16] {strides = array<i32: 2, 1>} : memref<32x64xf32, #tpu.memory_space<vmem>>, vector<7x64xf32>
    %c8_17 = arith.constant 8 : index
    %c256_18 = arith.constant 256 : index
    %15 = vector.load %arg11[%c8_17, %c256_18] : memref<16x512xf32, #tpu.memory_space<vmem>>, vector<7x64xf32>
    tpu.vector_store %arg11[%c8_17, %c256_18], %14 {strides = array<i32>} : memref<16x512xf32, #tpu.memory_space<vmem>>, vector<7x64xf32>,
    %c19 = arith.constant 19 : index
    %c0_19 = arith.constant 0 : index
    %16 = tpu.strided_load %arg1[%c19, %c0_19] {strides = array<i32: 2, 1>} : memref<32x64xf32, #tpu.memory_space<vmem>>, vector<7x64xf32>
    %c8_20 = arith.constant 8 : index
    %c384_21 = arith.constant 384 : index
    %17 = vector.load %arg11[%c8_20, %c384_21] : memref<16x512xf32, #tpu.memory_space<vmem>>, vector<7x64xf32>
    tpu.vector_store %arg11[%c8_20, %c384_21], %16 {strides = array<i32>} : memref<16x512xf32, #tpu.memory_space<vmem>>, vector<7x64xf32>,
    %c0_22 = arith.constant 0 : index
    %c0_23 = arith.constant 0 : index
    %18 = vector.load %arg11[%c0_22, %c0_23] : memref<16x512xf32, #tpu.memory_space<vmem>>, vector<16x512xf32>
    %19 = arith.truncf %18 : vector<16x512xf32> to vector<16x512xbf16>
    %c0_24 = arith.constant 0 : index
    %c0_25 = arith.constant 0 : index
    %20 = vector.load %arg2[%c0_24, %c0_25] : memref<512x56xbf16, #tpu.memory_space<vmem>>, vector<512x56xbf16>
    %cst_26 = arith.constant dense<0.000000e+00> : vector<16x56xf32>
    %21 = tpu.matmul %19, %20, %cst_26 {dimension_numbers = #tpu.dot_dimension_numbers<[1], [0], [0], [1], [0, 0, 1, 1], [], []>} : vector<16x512xbf16>, vector<512x56xbf16>, vector<16x56xf32> -> vector<16x56xf32>
    %c0_27 = arith.constant 0 : index
    %c0_28 = arith.constant 0 : index
    %22 = vector.load %arg3[%c0_27, %c0_28] : memref<1x56xf32, #tpu.memory_space<vmem>>, vector<1x56xf32>
    %23 = vector.broadcast %22 : vector<1x56xf32> to vector<16x56xf32>
    %24 = arith.addf %21, %23 : vector<16x56xf32>
    %cst_29 = arith.constant 0.000000e+00 : f32
    %25 = vector.broadcast %cst_29 : f32 to vector<16x56xf32>
    %26 = arith.maximumf %24, %25 : vector<16x56xf32>
    %c0_30 = arith.constant 0 : index
    %c0_31 = arith.constant 0 : index
    %27 = vector.load %arg12[%c0_30, %c0_31] : memref<16x56xf32, #tpu.memory_space<vmem>>, vector<16x56xf32>
    tpu.vector_store %arg12[%c0_30, %c0_31], %26 {strides = array<i32>} : memref<16x56xf32, #tpu.memory_space<vmem>>, vector<16x56xf32>,
    %cst_32 = arith.constant 0.000000e+00 : f32
    %28 = vector.broadcast %cst_32 : f32 to vector<16x384xf32>
    %c0_33 = arith.constant 0 : index
    %c0_34 = arith.constant 0 : index
    %29 = vector.load %arg13[%c0_33, %c0_34] : memref<16x384xf32, #tpu.memory_space<vmem>>, vector<16x384xf32>
    tpu.vector_store %arg13[%c0_33, %c0_34], %28 {strides = array<i32>} : memref<16x384xf32, #tpu.memory_space<vmem>>, vector<16x384xf32>,
    %c0_35 = arith.constant 0 : index
    %c0_36 = arith.constant 0 : index
    %30 = vector.load %arg12[%c0_35, %c0_36] : memref<16x56xf32, #tpu.memory_space<vmem>>, vector<5x56xf32>
    %c0_37 = arith.constant 0 : index
    %c0_38 = arith.constant 0 : index
    %31 = vector.load %arg13[%c0_37, %c0_38] : memref<16x384xf32, #tpu.memory_space<vmem>>, vector<5x56xf32>
    tpu.vector_store %arg13[%c0_37, %c0_38], %30 {strides = array<i32>} : memref<16x384xf32, #tpu.memory_space<vmem>>, vector<5x56xf32>,
    %c1_39 = arith.constant 1 : index
    %c0_40 = arith.constant 0 : index
    %32 = vector.load %arg12[%c1_39, %c0_40] : memref<16x56xf32, #tpu.memory_space<vmem>>, vector<5x56xf32>
    %c0_41 = arith.constant 0 : index
    %c128_42 = arith.constant 128 : index
    %33 = vector.load %arg13[%c0_41, %c128_42] : memref<16x384xf32, #tpu.memory_space<vmem>>, vector<5x56xf32>
    tpu.vector_store %arg13[%c0_41, %c128_42], %32 {strides = array<i32>} : memref<16x384xf32, #tpu.memory_space<vmem>>, vector<5x56xf32>,
    %c2_43 = arith.constant 2 : index
    %c0_44 = arith.constant 0 : index
    %34 = vector.load %arg12[%c2_43, %c0_44] : memref<16x56xf32, #tpu.memory_space<vmem>>, vector<5x56xf32>
    %c0_45 = arith.constant 0 : index
    %c256_46 = arith.constant 256 : index
    %35 = vector.load %arg13[%c0_45, %c256_46] : memref<16x384xf32, #tpu.memory_space<vmem>>, vector<5x56xf32>
    tpu.vector_store %arg13[%c0_45, %c256_46], %34 {strides = array<i32>} : memref<16x384xf32, #tpu.memory_space<vmem>>, vector<5x56xf32>,
    %c8_47 = arith.constant 8 : index
    %c0_48 = arith.constant 0 : index
    %36 = vector.load %arg12[%c8_47, %c0_48] : memref<16x56xf32, #tpu.memory_space<vmem>>, vector<5x56xf32>
    %c8_49 = arith.constant 8 : index
    %c0_50 = arith.constant 0 : index
    %37 = vector.load %arg13[%c8_49, %c0_50] : memref<16x384xf32, #tpu.memory_space<vmem>>, vector<5x56xf32>
    tpu.vector_store %arg13[%c8_49, %c0_50], %36 {strides = array<i32>} : memref<16x384xf32, #tpu.memory_space<vmem>>, vector<5x56xf32>,
    %c9 = arith.constant 9 : index
    %c0_51 = arith.constant 0 : index
    %38 = vector.load %arg12[%c9, %c0_51] : memref<16x56xf32, #tpu.memory_space<vmem>>, vector<5x56xf32>
    %c8_52 = arith.constant 8 : index
    %c128_53 = arith.constant 128 : index
    %39 = vector.load %arg13[%c8_52, %c128_53] : memref<16x384xf32, #tpu.memory_space<vmem>>, vector<5x56xf32>
    tpu.vector_store %arg13[%c8_52, %c128_53], %38 {strides = array<i32>} : memref<16x384xf32, #tpu.memory_space<vmem>>, vector<5x56xf32>,
    %c10 = arith.constant 10 : index
    %c0_54 = arith.constant 0 : index
    %40 = vector.load %arg12[%c10, %c0_54] : memref<16x56xf32, #tpu.memory_space<vmem>>, vector<5x56xf32>
    %c8_55 = arith.constant 8 : index
    %c256_56 = arith.constant 256 : index
    %41 = vector.load %arg13[%c8_55, %c256_56] : memref<16x384xf32, #tpu.memory_space<vmem>>, vector<5x56xf32>
    tpu.vector_store %arg13[%c8_55, %c256_56], %40 {strides = array<i32>} : memref<16x384xf32, #tpu.memory_space<vmem>>, vector<5x56xf32>,
    %c0_57 = arith.constant 0 : index
    %c0_58 = arith.constant 0 : index
    %42 = vector.load %arg13[%c0_57, %c0_58] : memref<16x384xf32, #tpu.memory_space<vmem>>, vector<16x384xf32>
    %43 = arith.truncf %42 : vector<16x384xf32> to vector<16x384xbf16>
    %c0_59 = arith.constant 0 : index
    %c0_60 = arith.constant 0 : index
    %44 = vector.load %arg4[%c0_59, %c0_60] : memref<384x80xbf16, #tpu.memory_space<vmem>>, vector<384x80xbf16>
    %cst_61 = arith.constant dense<0.000000e+00> : vector<16x80xf32>
    %45 = tpu.matmul %43, %44, %cst_61 {dimension_numbers = #tpu.dot_dimension_numbers<[1], [0], [0], [1], [0, 0, 1, 1], [], []>} : vector<16x384xbf16>, vector<384x80xbf16>, vector<16x80xf32> -> vector<16x80xf32>
    %c0_62 = arith.constant 0 : index
    %c0_63 = arith.constant 0 : index
    %46 = vector.load %arg5[%c0_62, %c0_63] : memref<1x80xf32, #tpu.memory_space<vmem>>, vector<1x80xf32>
    %47 = vector.broadcast %46 : vector<1x80xf32> to vector<16x80xf32>
    %48 = arith.addf %45, %47 : vector<16x80xf32>
    %cst_64 = arith.constant 0.000000e+00 : f32
    %49 = vector.broadcast %cst_64 : f32 to vector<16x80xf32>
    %50 = arith.maximumf %48, %49 : vector<16x80xf32>
    %c0_65 = arith.constant 0 : index
    %c0_66 = arith.constant 0 : index
    %51 = vector.load %arg14[%c0_65, %c0_66] : memref<16x80xf32, #tpu.memory_space<vmem>>, vector<16x80xf32>
    tpu.vector_store %arg14[%c0_65, %c0_66], %50 {strides = array<i32>} : memref<16x80xf32, #tpu.memory_space<vmem>>, vector<16x80xf32>,
    %cst_67 = arith.constant 0.000000e+00 : f32
    %52 = vector.broadcast %cst_67 : f32 to vector<2x32xf32>
    %c0_68 = arith.constant 0 : index
    %c0_69 = arith.constant 0 : index
    %53 = tpu.strided_load %arg14[%c0_68, %c0_69] {strides = array<i32: 8, 1>} : memref<16x80xf32, #tpu.memory_space<vmem>>, vector<2x80xf32>
    %54 = arith.truncf %53 : vector<2x80xf32> to vector<2x80xbf16>
    %c0_70 = arith.constant 0 : index
    %c0_71 = arith.constant 0 : index
    %55 = vector.load %arg6[%c0_70, %c0_71] : memref<400x32xbf16, #tpu.memory_space<vmem>>, vector<80x32xbf16>
    %cst_72 = arith.constant dense<0.000000e+00> : vector<2x32xf32>
    %56 = tpu.matmul %54, %55, %cst_72 {dimension_numbers = #tpu.dot_dimension_numbers<[1], [0], [0], [1], [0, 0, 1, 1], [], []>} : vector<2x80xbf16>, vector<80x32xbf16>, vector<2x32xf32> -> vector<2x32xf32>
    %57 = arith.addf %52, %56 : vector<2x32xf32>
    %c1_73 = arith.constant 1 : index
    %c0_74 = arith.constant 0 : index
    %58 = tpu.strided_load %arg14[%c1_73, %c0_74] {strides = array<i32: 8, 1>} : memref<16x80xf32, #tpu.memory_space<vmem>>, vector<2x80xf32>
    %59 = arith.truncf %58 : vector<2x80xf32> to vector<2x80xbf16>
    %c80 = arith.constant 80 : index
    %c0_75 = arith.constant 0 : index
    %60 = vector.load %arg6[%c80, %c0_75] : memref<400x32xbf16, #tpu.memory_space<vmem>>, vector<80x32xbf16>
    %cst_76 = arith.constant dense<0.000000e+00> : vector<2x32xf32>
    %61 = tpu.matmul %59, %60, %cst_76 {dimension_numbers = #tpu.dot_dimension_numbers<[1], [0], [0], [1], [0, 0, 1, 1], [], []>} : vector<2x80xbf16>, vector<80x32xbf16>, vector<2x32xf32> -> vector<2x32xf32>
    %62 = arith.addf %57, %61 : vector<2x32xf32>
    %c2_77 = arith.constant 2 : index
    %c0_78 = arith.constant 0 : index
    %63 = tpu.strided_load %arg14[%c2_77, %c0_78] {strides = array<i32: 8, 1>} : memref<16x80xf32, #tpu.memory_space<vmem>>, vector<2x80xf32>
    %64 = arith.truncf %63 : vector<2x80xf32> to vector<2x80xbf16>
    %c160 = arith.constant 160 : index
    %c0_79 = arith.constant 0 : index
    %65 = vector.load %arg6[%c160, %c0_79] : memref<400x32xbf16, #tpu.memory_space<vmem>>, vector<80x32xbf16>
    %cst_80 = arith.constant dense<0.000000e+00> : vector<2x32xf32>
    %66 = tpu.matmul %64, %65, %cst_80 {dimension_numbers = #tpu.dot_dimension_numbers<[1], [0], [0], [1], [0, 0, 1, 1], [], []>} : vector<2x80xbf16>, vector<80x32xbf16>, vector<2x32xf32> -> vector<2x32xf32>
    %67 = arith.addf %62, %66 : vector<2x32xf32>
    %c3_81 = arith.constant 3 : index
    %c0_82 = arith.constant 0 : index
    %68 = tpu.strided_load %arg14[%c3_81, %c0_82] {strides = array<i32: 8, 1>} : memref<16x80xf32, #tpu.memory_space<vmem>>, vector<2x80xf32>
    %69 = arith.truncf %68 : vector<2x80xf32> to vector<2x80xbf16>
    %c240 = arith.constant 240 : index
    %c0_83 = arith.constant 0 : index
    %70 = vector.load %arg6[%c240, %c0_83] : memref<400x32xbf16, #tpu.memory_space<vmem>>, vector<80x32xbf16>
    %cst_84 = arith.constant dense<0.000000e+00> : vector<2x32xf32>
    %71 = tpu.matmul %69, %70, %cst_84 {dimension_numbers = #tpu.dot_dimension_numbers<[1], [0], [0], [1], [0, 0, 1, 1], [], []>} : vector<2x80xbf16>, vector<80x32xbf16>, vector<2x32xf32> -> vector<2x32xf32>
    %72 = arith.addf %67, %71 : vector<2x32xf32>
    %c4 = arith.constant 4 : index
    %c0_85 = arith.constant 0 : index
    %73 = tpu.strided_load %arg14[%c4, %c0_85] {strides = array<i32: 8, 1>} : memref<16x80xf32, #tpu.memory_space<vmem>>, vector<2x80xf32>
    %74 = arith.truncf %73 : vector<2x80xf32> to vector<2x80xbf16>
    %c320 = arith.constant 320 : index
    %c0_86 = arith.constant 0 : index
    %75 = vector.load %arg6[%c320, %c0_86] : memref<400x32xbf16, #tpu.memory_space<vmem>>, vector<80x32xbf16>
    %cst_87 = arith.constant dense<0.000000e+00> : vector<2x32xf32>
    %76 = tpu.matmul %74, %75, %cst_87 {dimension_numbers = #tpu.dot_dimension_numbers<[1], [0], [0], [1], [0, 0, 1, 1], [], []>} : vector<2x80xbf16>, vector<80x32xbf16>, vector<2x32xf32> -> vector<2x32xf32>
    %77 = arith.addf %72, %76 : vector<2x32xf32>
    %c0_88 = arith.constant 0 : index
    %c0_89 = arith.constant 0 : index
    %78 = vector.load %arg7[%c0_88, %c0_89] : memref<1x32xf32, #tpu.memory_space<vmem>>, vector<1x32xf32>
    %79 = vector.broadcast %78 : vector<1x32xf32> to vector<2x32xf32>
    %80 = arith.addf %77, %79 : vector<2x32xf32>
    %cst_90 = arith.constant 0.000000e+00 : f32
    %81 = vector.broadcast %cst_90 : f32 to vector<2x32xf32>
    %82 = arith.maximumf %80, %81 : vector<2x32xf32>
    %83 = arith.truncf %82 : vector<2x32xf32> to vector<2x32xbf16>
    %c0_91 = arith.constant 0 : index
    %c0_92 = arith.constant 0 : index
    %84 = vector.load %arg8[%c0_91, %c0_92] : memref<32x128xbf16, #tpu.memory_space<vmem>>, vector<32x128xbf16>
    %cst_93 = arith.constant dense<0.000000e+00> : vector<2x128xf32>
    %85 = tpu.matmul %83, %84, %cst_93 {dimension_numbers = #tpu.dot_dimension_numbers<[1], [0], [0], [1], [0, 0, 1, 1], [], []>} : vector<2x32xbf16>, vector<32x128xbf16>, vector<2x128xf32> -> vector<2x128xf32>
    %c0_94 = arith.constant 0 : index
    %c0_95 = arith.constant 0 : index
    %86 = vector.load %arg9[%c0_94, %c0_95] : memref<1x128xf32, #tpu.memory_space<vmem>>, vector<1x128xf32>
    %87 = vector.broadcast %86 : vector<1x128xf32> to vector<2x128xf32>
    %88 = arith.addf %85, %87 : vector<2x128xf32>
    %c0_96 = arith.constant 0 : index
    %c0_97 = arith.constant 0 : index
    %89 = vector.load %arg10[%c0_96, %c0_97] : memref<2x128xf32, #tpu.memory_space<vmem>>, vector<2x128xf32>
    tpu.vector_store %arg10[%c0_96, %c0_97], %88 {strides = array<i32>} : memref<2x128xf32, #tpu.memory_space<vmem>>, vector<2x128xf32>,
    return
  }
  func.func @transform_0(%arg0: i32) -> (i32, i32) {
    %c0_i32 = arith.constant 0 : i32
    %c0_i32_0 = arith.constant 0 : i32
    return %arg0, %c0_i32 : i32, i32
  }
  func.func @transform_1(%arg0: i32) -> (i32, i32) {
    %c0_i32 = arith.constant 0 : i32
    %c0_i32_0 = arith.constant 0 : i32
    %c0_i32_1 = arith.constant 0 : i32
    return %c0_i32, %c0_i32_0 : i32, i32
  }
  func.func @transform_2(%arg0: i32) -> (i32, i32) {
    %c0_i32 = arith.constant 0 : i32
    %c0_i32_0 = arith.constant 0 : i32
    %c0_i32_1 = arith.constant 0 : i32
    return %c0_i32, %c0_i32_0 : i32, i32
  }
  func.func @transform_3(%arg0: i32) -> (i32, i32) {
    %c0_i32 = arith.constant 0 : i32
    %c0_i32_0 = arith.constant 0 : i32
    %c0_i32_1 = arith.constant 0 : i32
    return %c0_i32, %c0_i32_0 : i32, i32
  }
  func.func @transform_4(%arg0: i32) -> (i32, i32) {
    %c0_i32 = arith.constant 0 : i32
    %c0_i32_0 = arith.constant 0 : i32
    %c0_i32_1 = arith.constant 0 : i32
    return %c0_i32, %c0_i32_0 : i32, i32
  }
  func.func @transform_5(%arg0: i32) -> (i32, i32) {
    %c0_i32 = arith.constant 0 : i32
    %c0_i32_0 = arith.constant 0 : i32
    %c0_i32_1 = arith.constant 0 : i32
    return %c0_i32, %c0_i32_0 : i32, i32
  }
  func.func @transform_6(%arg0: i32) -> (i32, i32) {
    %c0_i32 = arith.constant 0 : i32
    %c0_i32_0 = arith.constant 0 : i32
    %c0_i32_1 = arith.constant 0 : i32
    return %c0_i32, %c0_i32_0 : i32, i32
  }
  func.func @transform_7(%arg0: i32) -> (i32, i32) {
    %c0_i32 = arith.constant 0 : i32
    %c0_i32_0 = arith.constant 0 : i32
    %c0_i32_1 = arith.constant 0 : i32
    return %c0_i32, %c0_i32_0 : i32, i32
  }
  func.func @transform_8(%arg0: i32) -> (i32, i32) {
    %c0_i32 = arith.constant 0 : i32
    %c0_i32_0 = arith.constant 0 : i32
    %c0_i32_1 = arith.constant 0 : i32
    return %c0_i32, %c0_i32_0 : i32, i32
  }
  func.func @transform_9(%arg0: i32) -> (i32, i32) {
    %c0_i32 = arith.constant 0 : i32
    %c0_i32_0 = arith.constant 0 : i32
    return %arg0, %c0_i32 : i32, i32
  }
}

</mosaic_0001>

<llo_original>
// kernel: forward.1
$region0: #{forward.1}
  #allocation0 [shape = 'u32[]', space=smem, size = 0x4, offset = 0x4, fixed_abs, tag = 'smem constant byte address 0x4 - core index']
  #allocation1 [shape = 'u32[72,128]{1,0:T(1,128)}', space=vmem, size = 0x9000, scoped, tag = 'internal scratch']
  #allocation2 [shape = 'f32[16,512]{1,0:T(8,128)}', space=vmem, size = 0x8000, scoped, tag = 'scratch operand']
  #allocation3 [shape = 'f32[16,56]{1,0:T(8,128)}', space=vmem, size = 0x2000, scoped, tag = 'scratch operand']
  #allocation4 [shape = 'f32[16,384]{1,0:T(8,128)}', space=vmem, size = 0x6000, scoped, tag = 'scratch operand']
  #allocation5 [shape = 'f32[16,80]{1,0:T(8,128)}', space=vmem, size = 0x2000, scoped, tag = 'scratch operand']
  %s0 = inlined_call_operand.vmem [shape: f32[32,64], index: 0, kind: input, shape index: {}]
  %s1 = inlined_call_operand.vmem [shape: bf16[512,56], index: 1, kind: input, shape index: {}]
  %s2 = inlined_call_operand.vmem [shape: f32[1,56], index: 2, kind: input, shape index: {}]
  %s3 = inlined_call_operand.hbm [shape: bf16[384,80], index: 3, kind: input, shape index: {}]
  %s4 = inlined_call_operand.vmem [shape: f32[1,80], index: 4, kind: input, shape index: {}]
  %s5 = inlined_call_operand.vmem [shape: bf16[400,32], index: 5, kind: input, shape index: {}]
  %s6 = inlined_call_operand.vmem [shape: f32[1,32], index: 6, kind: input, shape index: {}]
  %s7 = inlined_call_operand.vmem [shape: bf16[32,128], index: 7, kind: input, shape index: {}]
  %s8 = inlined_call_operand.vmem [shape: f32[1,128], index: 8, kind: input, shape index: {}]
  %s9 = inlined_call_operand.hbm [shape: f32[2,128], index: 9, kind: output, shape index: {}]
  %s10 = sld [smem:[#allocation0]]
  $region50: #{forward.1} parent=0
    _
  %s12 = ssub.s32 1, %s10
  %s13 = scalar_select 0, %s12, %s10
  $region1: #{forward.1} parent=0
    #allocation6 [shape = 'u8[98304]{0}', space=vmem, size = 0x18000, scoped, tag = 'input window, operand 3, single buffered']
    #allocation7 [shape = 's32[1]{0}', space=sflag, size = 0x4, scoped, tag = 'scoped memory for forward.1']
    #allocation8 [shape = 's32[1]{0}', space=sflag, size = 0x4, scoped, tag = 'scoped memory for forward.1']
    #allocation9 [shape = 'u8[1024]{0}', space=vmem, size = 0x400, scoped, tag = 'output window, operand 0, single buffered']
    %14 = vsyncpa [#allocation7], 0
    %15 = vsyncpa [#allocation8], 0
    // Predicated region
    $region2: #{forward.1} parent=1 // pred_check
      _
    $region3: #{forward.1} parent=1 // pred_check_branch
      %17 = sbr.rel (0) target = $region5
    $region4: #{forward.1} parent=1 // pred_region
      _
    $region5: #{forward.1} parent=1 // pred_fallthru
      _
    // Predicated region
    $region6: #{forward.1} parent=1 // pred_check
      _
    $region7: #{forward.1} parent=1 // pred_check_branch
      %19 = sbr.rel (0) target = $region9
    $region8: #{forward.1} parent=1 // pred_region
      _
    $region9: #{forward.1} parent=1 // pred_fallthru
      _
    // Predicated region
    $region10: #{forward.1} parent=1 // pred_check
      _
    $region11: #{forward.1} parent=1 // pred_check_branch
      %21 = sbr.rel (0) target = $region13
    $region12: #{forward.1} parent=1 // pred_region
      _
    $region13: #{forward.1} parent=1 // pred_fallthru
      _
    // Predicated region
    $region14: #{forward.1} parent=1 // pred_check
      _
    $region15: #{forward.1} parent=1 // pred_check_branch
      %23 = sbr.rel (0) target = $region17
    $region16: #{forward.1} parent=1 // pred_region
      %25 = vsyncadd [#allocation7], 0
      %s26 = sshll.u32 %s3, 4
      %s27 = int_to_ptr.hbm [resolvable:$true] %s26
      %s28 = sshll.u32 [#allocation6], 4
      %s29 = int_to_ptr.vmem [resolvable:$true] %s28
      %34 = dma.hbm_to_vmem [thread:$0]  %s27, 3072, %s29, [#allocation7], 64, 64, 4
    $region17: #{forward.1} parent=1 // pred_fallthru
      _
    // Predicated region
    $region18: #{forward.1} parent=1 // pred_check
      _
    $region19: #{forward.1} parent=1 // pred_check_branch
      %36 = sbr.rel (0) target = $region21
    $region20: #{forward.1} parent=1 // pred_region
      _
    $region21: #{forward.1} parent=1 // pred_fallthru
      _
    // Predicated region
    $region22: #{forward.1} parent=1 // pred_check
      _
    $region23: #{forward.1} parent=1 // pred_check_branch
      %38 = sbr.rel (0) target = $region25
    $region24: #{forward.1} parent=1 // pred_region
      _
    $region25: #{forward.1} parent=1 // pred_fallthru
      _
    // Predicated region
    $region26: #{forward.1} parent=1 // pred_check
      _
    $region27: #{forward.1} parent=1 // pred_check_branch
      %40 = sbr.rel (0) target = $region29
    $region28: #{forward.1} parent=1 // pred_region
      _
    $region29: #{forward.1} parent=1 // pred_fallthru
      _
    // Predicated region
    $region30: #{forward.1} parent=1 // pred_check
      _
    $region31: #{forward.1} parent=1 // pred_check_branch
      %42 = sbr.rel (0) target = $region33
    $region32: #{forward.1} parent=1 // pred_region
      _
    $region33: #{forward.1} parent=1 // pred_fallthru
      _
    // Predicated region
    $region34: #{forward.1} parent=1 // pred_check
      _
    $region35: #{forward.1} parent=1 // pred_check_branch
      %44 = sbr.rel (0) target = $region37
    $region36: #{forward.1} parent=1 // pred_region
      _
    $region37: #{forward.1} parent=1 // pred_fallthru
      _
    // Predicated region
    $region38: #{forward.1} parent=1 // pred_check
      _
    $region39: #{forward.1} parent=1 // pred_check_branch
      %46 = sbr.rel (0) target = $region41
    $region40: #{forward.1} parent=1 // pred_region
      %48 = dma.done [#allocation7], 3072
    $region41: #{forward.1} parent=1 // pred_fallthru
      _
    %50 = vst [vmem:[#allocation2] sm:$0xff] 0.0
    %51 = vst [vmem:[#allocation2 + $0x8] sm:$0xff] 0.0
    %52 = vst [vmem:[#allocation2 + $0x10] sm:$0xff] 0.0
    %53 = vst [vmem:[#allocation2 + $0x18] sm:$0xff] 0.0
    %54 = vst [vmem:[#allocation2 + $0x20] sm:$0xff] 0.0
    %55 = vst [vmem:[#allocation2 + $0x28] sm:$0xff] 0.0
    %56 = vst [vmem:[#allocation2 + $0x30] sm:$0xff] 0.0
    %57 = vst [vmem:[#allocation2 + $0x38] sm:$0xff] 0.0
    %v58 = vld [vmem:[%s0] ss:$2 sm:$0x7f]
    %vm59 = vcmask 522240
    %60 = vst.msk [vmem:[#allocation2] sm:$0x7f] %vm59, %v58
    %s61 = scalar_lea.vmem %s0, 1
    %v62 = vld [vmem:[%s61] ss:$2 sm:$0x7f]
    %63 = vst.msk [vmem:[#allocation2 + $0x8] sm:$0x7f] %vm59, %v62
    %s64 = scalar_lea.vmem %s0, 2
    %v65 = vld [vmem:[%s64] ss:$2 sm:$0x7f]
    %66 = vst.msk [vmem:[#allocation2 + $0x10] sm:$0x7f] %vm59, %v65
    %s67 = scalar_lea.vmem %s0, 3
    %v68 = vld [vmem:[%s67] ss:$2 sm:$0x7f]
    %69 = vst.msk [vmem:[#allocation2 + $0x18] sm:$0x7f] %vm59, %v68
    %s70 = scalar_lea.vmem %s0, 16
    %v71 = vld [vmem:[%s70] ss:$2 sm:$0x7f]
    %72 = vst.msk [vmem:[#allocation2 + $0x20] sm:$0x7f] %vm59, %v71
    %s73 = scalar_lea.vmem %s0, 17
    %v74 = vld [vmem:[%s73] ss:$2 sm:$0x7f]
    %75 = vst.msk [vmem:[#allocation2 + $0x28] sm:$0x7f] %vm59, %v74
    %s76 = scalar_lea.vmem %s0, 18
    %v77 = vld [vmem:[%s76] ss:$2 sm:$0x7f]
    %78 = vst.msk [vmem:[#allocation2 + $0x30] sm:$0x7f] %vm59, %v77
    %s79 = scalar_lea.vmem %s0, 19
    %v80 = vld [vmem:[%s79] ss:$2 sm:$0x7f]
    %81 = vst.msk [vmem:[#allocation2 + $0x38] sm:$0x7f] %vm59, %v80
    %v82 = vld [vmem:[#allocation2] sm:$0xff]
    %v83 = vld [vmem:[#allocation2 + $0x8] sm:$0xff]
    %v84 = vld [vmem:[#allocation2 + $0x10] sm:$0xff]
    %v85 = vld [vmem:[#allocation2 + $0x18] sm:$0xff]
    %v86 = vld [vmem:[#allocation2 + $0x20] sm:$0xff]
    %v87 = vld [vmem:[#allocation2 + $0x28] sm:$0xff]
    %v88 = vld [vmem:[#allocation2 + $0x30] sm:$0xff]
    %v89 = vld [vmem:[#allocation2 + $0x38] sm:$0xff]
    %v90 = vpack.c.bf16 %v86, %v82
    %v91 = vpack.c.bf16 %v87, %v83
    %v92 = vpack.c.bf16 %v88, %v84
    %v93 = vpack.c.bf16 %v89, %v85
    %v94 = vld [vmem:[%s1] sm:$0xf]
    %v95 = vld [vmem:[%s1 + $0x4] sm:$0xf]
    %v96 = vld [vmem:[%s1 + $0x8] sm:$0xf]
    %v97 = vld [vmem:[%s1 + $0xc] sm:$0xf]
    %v98 = vld [vmem:[%s1 + $0x10] sm:$0xf]
    %v99 = vld [vmem:[%s1 + $0x14] sm:$0xf]
    %v100 = vld [vmem:[%s1 + $0x18] sm:$0xf]
    %v101 = vld [vmem:[%s1 + $0x1c] sm:$0xf]
    %v102 = vld [vmem:[%s1 + $0x20] sm:$0xf]
    %v103 = vld [vmem:[%s1 + $0x24] sm:$0xf]
    %v104 = vld [vmem:[%s1 + $0x28] sm:$0xf]
    %v105 = vld [vmem:[%s1 + $0x2c] sm:$0xf]
    %v106 = vld [vmem:[%s1 + $0x30] sm:$0xf]
    %v107 = vld [vmem:[%s1 + $0x34] sm:$0xf]
    %v108 = vld [vmem:[%s1 + $0x38] sm:$0xf]
    %v109 = vld [vmem:[%s1 + $0x3c] sm:$0xf]
    %v110 = vld [vmem:[%s1 + $0x40] sm:$0xf]
    %v111 = vld [vmem:[%s1 + $0x44] sm:$0xf]
    %v112 = vld [vmem:[%s1 + $0x48] sm:$0xf]
    %v113 = vld [vmem:[%s1 + $0x4c] sm:$0xf]
    %v114 = vld [vmem:[%s1 + $0x50] sm:$0xf]
    %v115 = vld [vmem:[%s1 + $0x54] sm:$0xf]
    %v116 = vld [vmem:[%s1 + $0x58] sm:$0xf]
    %v117 = vld [vmem:[%s1 + $0x5c] sm:$0xf]
    %v118 = vld [vmem:[%s1 + $0x60] sm:$0xf]
    %v119 = vld [vmem:[%s1 + $0x64] sm:$0xf]
    %v120 = vld [vmem:[%s1 + $0x68] sm:$0xf]
    %v121 = vld [vmem:[%s1 + $0x6c] sm:$0xf]
    %v122 = vld [vmem:[%s1 + $0x70] sm:$0xf]
    %v123 = vld [vmem:[%s1 + $0x74] sm:$0xf]
    %v124 = vld [vmem:[%s1 + $0x78] sm:$0xf]
    %v125 = vld [vmem:[%s1 + $0x7c] sm:$0xf]
    %v126 = vld [vmem:[%s1 + $0x80] sm:$0xf]
    %v127 = vld [vmem:[%s1 + $0x84] sm:$0xf]
    %v128 = vld [vmem:[%s1 + $0x88] sm:$0xf]
    %v129 = vld [vmem:[%s1 + $0x8c] sm:$0xf]
    %v130 = vld [vmem:[%s1 + $0x90] sm:$0xf]
    %v131 = vld [vmem:[%s1 + $0x94] sm:$0xf]
    %v132 = vld [vmem:[%s1 + $0x98] sm:$0xf]
    %v133 = vld [vmem:[%s1 + $0x9c] sm:$0xf]
    %v134 = vld [vmem:[%s1 + $0xa0] sm:$0xf]
    %v135 = vld [vmem:[%s1 + $0xa4] sm:$0xf]
    %v136 = vld [vmem:[%s1 + $0xa8] sm:$0xf]
    %v137 = vld [vmem:[%s1 + $0xac] sm:$0xf]
    %v138 = vld [vmem:[%s1 + $0xb0] sm:$0xf]
    %v139 = vld [vmem:[%s1 + $0xb4] sm:$0xf]
    %v140 = vld [vmem:[%s1 + $0xb8] sm:$0xf]
    %v141 = vld [vmem:[%s1 + $0xbc] sm:$0xf]
    %v142 = vld [vmem:[%s1 + $0xc0] sm:$0xf]
    %v143 = vld [vmem:[%s1 + $0xc4] sm:$0xf]
    %v144 = vld [vmem:[%s1 + $0xc8] sm:$0xf]
    %v145 = vld [vmem:[%s1 + $0xcc] sm:$0xf]
    %v146 = vld [vmem:[%s1 + $0xd0] sm:$0xf]
    %v147 = vld [vmem:[%s1 + $0xd4] sm:$0xf]
    %v148 = vld [vmem:[%s1 + $0xd8] sm:$0xf]
    %v149 = vld [vmem:[%s1 + $0xdc] sm:$0xf]
    %v150 = vld [vmem:[%s1 + $0xe0] sm:$0xf]
    %v151 = vld [vmem:[%s1 + $0xe4] sm:$0xf]
    %v152 = vld [vmem:[%s1 + $0xe8] sm:$0xf]
    %v153 = vld [vmem:[%s1 + $0xec] sm:$0xf]
    %v154 = vld [vmem:[%s1 + $0xf0] sm:$0xf]
    %v155 = vld [vmem:[%s1 + $0xf4] sm:$0xf]
    %v156 = vld [vmem:[%s1 + $0xf8] sm:$0xf]
    %v157 = vld [vmem:[%s1 + $0xfc] sm:$0xf]
    %v158 = vld [vmem:[%s2] sm:$0x1]
    %v160 = vperm.slane %v158, 0
    %v226 = vunpack.c.l.b16 %v94
    %v227 = vunpack.c.l.b16 %v95
    %v228 = vunpack.c.l.b16 %v96
    %v229 = vunpack.c.l.b16 %v97
    %v230 = vunpack.c.l.b16 %v98
    %v231 = vunpack.c.l.b16 %v99
    %v232 = vunpack.c.l.b16 %v100
    %v233 = vunpack.c.l.b16 %v101
    %v234 = vunpack.c.l.b16 %v102
    %v235 = vunpack.c.l.b16 %v103
    %v236 = vunpack.c.l.b16 %v104
    %v237 = vunpack.c.l.b16 %v105
    %v238 = vunpack.c.l.b16 %v106
    %v239 = vunpack.c.l.b16 %v107
    %v240 = vunpack.c.l.b16 %v108
    %v241 = vunpack.c.l.b16 %v109
    %v242 = vunpack.c.l.b16 %v110
    %v243 = vunpack.c.l.b16 %v111
    %v244 = vunpack.c.l.b16 %v112
    %v245 = vunpack.c.l.b16 %v113
    %v246 = vunpack.c.l.b16 %v114
    %v247 = vunpack.c.l.b16 %v115
    %v248 = vunpack.c.l.b16 %v116
    %v249 = vunpack.c.l.b16 %v117
    %v250 = vunpack.c.l.b16 %v118
    %v251 = vunpack.c.l.b16 %v119
    %v252 = vunpack.c.l.b16 %v120
    %v253 = vunpack.c.l.b16 %v121
    %v254 = vunpack.c.l.b16 %v122
    %v255 = vunpack.c.l.b16 %v123
    %v256 = vunpack.c.l.b16 %v124
    %v257 = vunpack.c.l.b16 %v125
    %v258 = vunpack.c.l.b16 %v126
    %v259 = vunpack.c.l.b16 %v127
    %v260 = vunpack.c.l.b16 %v128
    %v261 = vunpack.c.l.b16 %v129
    %v262 = vunpack.c.l.b16 %v130
    %v263 = vunpack.c.l.b16 %v131
    %v264 = vunpack.c.l.b16 %v132
    %v265 = vunpack.c.l.b16 %v133
    %v266 = vunpack.c.l.b16 %v134
    %v267 = vunpack.c.l.b16 %v135
    %v268 = vunpack.c.l.b16 %v136
    %v269 = vunpack.c.l.b16 %v137
    %v270 = vunpack.c.l.b16 %v138
    %v271 = vunpack.c.l.b16 %v139
    %v272 = vunpack.c.l.b16 %v140
    %v273 = vunpack.c.l.b16 %v141
    %v274 = vunpack.c.l.b16 %v142
    %v275 = vunpack.c.l.b16 %v143
    %v276 = vunpack.c.l.b16 %v144
    %v277 = vunpack.c.l.b16 %v145
    %v278 = vunpack.c.l.b16 %v146
    %v279 = vunpack.c.l.b16 %v147
    %v280 = vunpack.c.l.b16 %v148
    %v281 = vunpack.c.l.b16 %v149
    %v282 = vunpack.c.l.b16 %v150
    %v283 = vunpack.c.l.b16 %v151
    %v284 = vunpack.c.l.b16 %v152
    %v285 = vunpack.c.l.b16 %v153
    %v286 = vunpack.c.l.b16 %v154
    %v287 = vunpack.c.l.b16 %v155
    %v288 = vunpack.c.l.b16 %v156
    %v289 = vunpack.c.l.b16 %v157
    %v290 = vpack.c.b16 %v227, %v226
    %v291 = vpack.c.b16 %v229, %v228
    %v292 = vpack.c.b16 %v231, %v230
    %v293 = vpack.c.b16 %v233, %v232
    %v294 = vpack.c.b16 %v235, %v234
    %v295 = vpack.c.b16 %v237, %v236
    %v296 = vpack.c.b16 %v239, %v238
    %v297 = vpack.c.b16 %v241, %v240
    %v298 = vpack.c.b16 %v243, %v242
    %v299 = vpack.c.b16 %v245, %v244
    %v300 = vpack.c.b16 %v247, %v246
    %v301 = vpack.c.b16 %v249, %v248
    %v302 = vpack.c.b16 %v251, %v250
    %v303 = vpack.c.b16 %v253, %v252
    %v304 = vpack.c.b16 %v255, %v254
    %v305 = vpack.c.b16 %v257, %v256
    %v306 = vpack.c.b16 %v259, %v258
    %v307 = vpack.c.b16 %v261, %v260
    %v308 = vpack.c.b16 %v263, %v262
    %v309 = vpack.c.b16 %v265, %v264
    %v310 = vpack.c.b16 %v267, %v266
    %v311 = vpack.c.b16 %v269, %v268
    %v312 = vpack.c.b16 %v271, %v270
    %v313 = vpack.c.b16 %v273, %v272
    %v314 = vpack.c.b16 %v275, %v274
    %v315 = vpack.c.b16 %v277, %v276
    %v316 = vpack.c.b16 %v279, %v278
    %v317 = vpack.c.b16 %v281, %v280
    %v318 = vpack.c.b16 %v283, %v282
    %v319 = vpack.c.b16 %v285, %v284
    %v320 = vpack.c.b16 %v287, %v286
    %v321 = vpack.c.b16 %v289, %v288
    %354 = vmatpush.bf16.msra.mxu0 %v297
    %355 = vmatpush.bf16.msra.mxu0 %v296
    %356 = vmatpush.bf16.msra.mxu0 %v295
    %357 = vmatpush.bf16.msra.mxu0 %v294
    %358 = vmatpush.bf16.msra.mxu0 %v293
    %359 = vmatpush.bf16.msra.mxu0 %v292
    %360 = vmatpush.bf16.msra.mxu0 %v291
    %361 = vmatpush.bf16.msra.mxu0 %v290
    %362 = vmatmul.bf16.gmra.mxu0 %v90
    %v363 = vpop.f32.mrf.mxu0
    %v364 = vadd.f32 %v160, %v363
    %v365 = vpop.f32.mrf.mxu0
    %v366 = vadd.f32 %v160, %v365
    %367 = vdwg.mxu0
    %368 = vmatpush.bf16.msra.mxu0 %v305
    %369 = vmatpush.bf16.msra.mxu0 %v304
    %370 = vmatpush.bf16.msra.mxu0 %v303
    %371 = vmatpush.bf16.msra.mxu0 %v302
    %372 = vmatpush.bf16.msra.mxu0 %v301
    %373 = vmatpush.bf16.msra.mxu0 %v300
    %374 = vmatpush.bf16.msra.mxu0 %v299
    %375 = vmatpush.bf16.msra.mxu0 %v298
    %376 = vmatmul.bf16.gmra.mxu0 %v91
    %v377 = vpop.f32.mrf.mxu0
    %v378 = vadd.f32 %v364, %v377
    %v379 = vpop.f32.mrf.mxu0
    %v380 = vadd.f32 %v366, %v379
    %381 = vdwg.mxu0
    %382 = vmatpush.bf16.msra.mxu0 %v313
    %383 = vmatpush.bf16.msra.mxu0 %v312
    %384 = vmatpush.bf16.msra.mxu0 %v311
    %385 = vmatpush.bf16.msra.mxu0 %v310
    %386 = vmatpush.bf16.msra.mxu0 %v309
    %387 = vmatpush.bf16.msra.mxu0 %v308
    %388 = vmatpush.bf16.msra.mxu0 %v307
    %389 = vmatpush.bf16.msra.mxu0 %v306
    %390 = vmatmul.bf16.gmra.mxu0 %v92
    %v391 = vpop.f32.mrf.mxu0
    %v392 = vadd.f32 %v378, %v391
    %v393 = vpop.f32.mrf.mxu0
    %v394 = vadd.f32 %v380, %v393
    %395 = vdwg.mxu0
    %396 = vmatpush.bf16.msra.mxu0 %v321
    %397 = vmatpush.bf16.msra.mxu0 %v320
    %398 = vmatpush.bf16.msra.mxu0 %v319
    %399 = vmatpush.bf16.msra.mxu0 %v318
    %400 = vmatpush.bf16.msra.mxu0 %v317
    %401 = vmatpush.bf16.msra.mxu0 %v316
    %402 = vmatpush.bf16.msra.mxu0 %v315
    %403 = vmatpush.bf16.msra.mxu0 %v314
    %404 = vmatmul.bf16.gmra.mxu0 %v93
    %v405 = vpop.f32.mrf.mxu0
    %v406 = vadd.f32 %v392, %v405
    %v407 = vpop.f32.mrf.mxu0
    %v408 = vadd.f32 %v394, %v407
    %409 = vdwg.mxu0
    %v410 = vmax.f32 %v406, 0.0
    %v411 = vmax.f32 %v408, 0.0
    %vm412 = vcmask 457728
    %413 = vst.msk [vmem:[#allocation3] sm:$0xff] %vm412, %v410
    %414 = vst.msk [vmem:[#allocation3 + $0x8] sm:$0xff] %vm412, %v411
    %415 = vst [vmem:[#allocation4] sm:$0xff] 0.0
    %416 = vst [vmem:[#allocation4 + $0x8] sm:$0xff] 0.0
    %417 = vst [vmem:[#allocation4 + $0x10] sm:$0xff] 0.0
    %418 = vst [vmem:[#allocation4 + $0x18] sm:$0xff] 0.0
    %419 = vst [vmem:[#allocation4 + $0x20] sm:$0xff] 0.0
    %420 = vst [vmem:[#allocation4 + $0x28] sm:$0xff] 0.0
    %v421 = vld [vmem:[#allocation3] sm:$0x1f]
    %vm422 = vcmask 454656
    %423 = vst.msk [vmem:[#allocation4] sm:$0x1f] %vm422, %v421
    %v424 = vld [vmem:[#allocation3 + $0x1] sm:$0x1f]
    %425 = vst.msk [vmem:[#allocation4 + $0x8] sm:$0x1f] %vm422, %v424
    %v426 = vld [vmem:[#allocation3 + $0x2] sm:$0x1f]
    %427 = vst.msk [vmem:[#allocation4 + $0x10] sm:$0x1f] %vm422, %v426
    %v428 = vld [vmem:[#allocation3 + $0x8] sm:$0x1f]
    %429 = vst.msk [vmem:[#allocation4 + $0x18] sm:$0x1f] %vm422, %v428
    %v430 = vld [vmem:[#allocation3 + $0x9] sm:$0x1f]
    %431 = vst.msk [vmem:[#allocation4 + $0x20] sm:$0x1f] %vm422, %v430
    %v432 = vld [vmem:[#allocation3 + $0xa] sm:$0x1f]
    %433 = vst.msk [vmem:[#allocation4 + $0x28] sm:$0x1f] %vm422, %v432
    %v434 = vld [vmem:[#allocation4] sm:$0xff]
    %v435 = vld [vmem:[#allocation4 + $0x8] sm:$0xff]
    %v436 = vld [vmem:[#allocation4 + $0x10] sm:$0xff]
    %v437 = vld [vmem:[#allocation4 + $0x18] sm:$0xff]
    %v438 = vld [vmem:[#allocation4 + $0x20] sm:$0xff]
    %v439 = vld [vmem:[#allocation4 + $0x28] sm:$0xff]
    %v440 = vpack.c.bf16 %v437, %v434
    %v441 = vpack.c.bf16 %v438, %v435
    %v442 = vpack.c.bf16 %v439, %v436
    %v443 = vld [vmem:[#allocation6] sm:$0xf]
    %v444 = vld [vmem:[#allocation6 + $0x4] sm:$0xf]
    %v445 = vld [vmem:[#allocation6 + $0x8] sm:$0xf]
    %v446 = vld [vmem:[#allocation6 + $0xc] sm:$0xf]
    %v447 = vld [vmem:[#allocation6 + $0x10] sm:$0xf]
    %v448 = vld [vmem:[#allocation6 + $0x14] sm:$0xf]
    %v449 = vld [vmem:[#allocation6 + $0x18] sm:$0xf]
    %v450 = vld [vmem:[#allocation6 + $0x1c] sm:$0xf]
    %v451 = vld [vmem:[#allocation6 + $0x20] sm:$0xf]
    %v452 = vld [vmem:[#allocation6 + $0x24] sm:$0xf]
    %v453 = vld [vmem:[#allocation6 + $0x28] sm:$0xf]
    %v454 = vld [vmem:[#allocation6 + $0x2c] sm:$0xf]
    %v455 = vld [vmem:[#allocation6 + $0x30] sm:$0xf]
    %v456 = vld [vmem:[#allocation6 + $0x34] sm:$0xf]
    %v457 = vld [vmem:[#allocation6 + $0x38] sm:$0xf]
    %v458 = vld [vmem:[#allocation6 + $0x3c] sm:$0xf]
    %v459 = vld [vmem:[#allocation6 + $0x40] sm:$0xf]
    %v460 = vld [vmem:[#allocation6 + $0x44] sm:$0xf]
    %v461 = vld [vmem:[#allocation6 + $0x48] sm:$0xf]
    %v462 = vld [vmem:[#allocation6 + $0x4c] sm:$0xf]
    %v463 = vld [vmem:[#allocation6 + $0x50] sm:$0xf]
    %v464 = vld [vmem:[#allocation6 + $0x54] sm:$0xf]
    %v465 = vld [vmem:[#allocation6 + $0x58] sm:$0xf]
    %v466 = vld [vmem:[#allocation6 + $0x5c] sm:$0xf]
    %v467 = vld [vmem:[#allocation6 + $0x60] sm:$0xf]
    %v468 = vld [vmem:[#allocation6 + $0x64] sm:$0xf]
    %v469 = vld [vmem:[#allocation6 + $0x68] sm:$0xf]
    %v470 = vld [vmem:[#allocation6 + $0x6c] sm:$0xf]
    %v471 = vld [vmem:[#allocation6 + $0x70] sm:$0xf]
    %v472 = vld [vmem:[#allocation6 + $0x74] sm:$0xf]
    %v473 = vld [vmem:[#allocation6 + $0x78] sm:$0xf]
    %v474 = vld [vmem:[#allocation6 + $0x7c] sm:$0xf]
    %v475 = vld [vmem:[#allocation6 + $0x80] sm:$0xf]
    %v476 = vld [vmem:[#allocation6 + $0x84] sm:$0xf]
    %v477 = vld [vmem:[#allocation6 + $0x88] sm:$0xf]
    %v478 = vld [vmem:[#allocation6 + $0x8c] sm:$0xf]
    %v479 = vld [vmem:[#allocation6 + $0x90] sm:$0xf]
    %v480 = vld [vmem:[#allocation6 + $0x94] sm:$0xf]
    %v481 = vld [vmem:[#allocation6 + $0x98] sm:$0xf]
    %v482 = vld [vmem:[#allocation6 + $0x9c] sm:$0xf]
    %v483 = vld [vmem:[#allocation6 + $0xa0] sm:$0xf]
    %v484 = vld [vmem:[#allocation6 + $0xa4] sm:$0xf]
    %v485 = vld [vmem:[#allocation6 + $0xa8] sm:$0xf]
    %v486 = vld [vmem:[#allocation6 + $0xac] sm:$0xf]
    %v487 = vld [vmem:[#allocation6 + $0xb0] sm:$0xf]
    %v488 = vld [vmem:[#allocation6 + $0xb4] sm:$0xf]
    %v489 = vld [vmem:[#allocation6 + $0xb8] sm:$0xf]
    %v490 = vld [vmem:[#allocation6 + $0xbc] sm:$0xf]
    %v491 = vld [vmem:[%s4] sm:$0x1]
    %v493 = vperm.slane %v491, 0
    %v543 = vunpack.c.l.b16 %v443
    %v544 = vunpack.c.l.b16 %v444
    %v545 = vunpack.c.l.b16 %v445
    %v546 = vunpack.c.l.b16 %v446
    %v547 = vunpack.c.l.b16 %v447
    %v548 = vunpack.c.l.b16 %v448
    %v549 = vunpack.c.l.b16 %v449
    %v550 = vunpack.c.l.b16 %v450
    %v551 = vunpack.c.l.b16 %v451
    %v552 = vunpack.c.l.b16 %v452
    %v553 = vunpack.c.l.b16 %v453
    %v554 = vunpack.c.l.b16 %v454
    %v555 = vunpack.c.l.b16 %v455
    %v556 = vunpack.c.l.b16 %v456
    %v557 = vunpack.c.l.b16 %v457
    %v558 = vunpack.c.l.b16 %v458
    %v559 = vunpack.c.l.b16 %v459
    %v560 = vunpack.c.l.b16 %v460
    %v561 = vunpack.c.l.b16 %v461
    %v562 = vunpack.c.l.b16 %v462
    %v563 = vunpack.c.l.b16 %v463
    %v564 = vunpack.c.l.b16 %v464
    %v565 = vunpack.c.l.b16 %v465
    %v566 = vunpack.c.l.b16 %v466
    %v567 = vunpack.c.l.b16 %v467
    %v568 = vunpack.c.l.b16 %v468
    %v569 = vunpack.c.l.b16 %v469
    %v570 = vunpack.c.l.b16 %v470
    %v571 = vunpack.c.l.b16 %v471
    %v572 = vunpack.c.l.b16 %v472
    %v573 = vunpack.c.l.b16 %v473
    %v574 = vunpack.c.l.b16 %v474
    %v575 = vunpack.c.l.b16 %v475
    %v576 = vunpack.c.l.b16 %v476
    %v577 = vunpack.c.l.b16 %v477
    %v578 = vunpack.c.l.b16 %v478
    %v579 = vunpack.c.l.b16 %v479
    %v580 = vunpack.c.l.b16 %v480
    %v581 = vunpack.c.l.b16 %v481
    %v582 = vunpack.c.l.b16 %v482
    %v583 = vunpack.c.l.b16 %v483
    %v584 = vunpack.c.l.b16 %v484
    %v585 = vunpack.c.l.b16 %v485
    %v586 = vunpack.c.l.b16 %v486
    %v587 = vunpack.c.l.b16 %v487
    %v588 = vunpack.c.l.b16 %v488
    %v589 = vunpack.c.l.b16 %v489
    %v590 = vunpack.c.l.b16 %v490
    %v591 = vpack.c.b16 %v544, %v543
    %v592 = vpack.c.b16 %v546, %v545
    %v593 = vpack.c.b16 %v548, %v547
    %v594 = vpack.c.b16 %v550, %v549
    %v595 = vpack.c.b16 %v552, %v551
    %v596 = vpack.c.b16 %v554, %v553
    %v597 = vpack.c.b16 %v556, %v555
    %v598 = vpack.c.b16 %v558, %v557
    %v599 = vpack.c.b16 %v560, %v559
    %v600 = vpack.c.b16 %v562, %v561
    %v601 = vpack.c.b16 %v564, %v563
    %v602 = vpack.c.b16 %v566, %v565
    %v603 = vpack.c.b16 %v568, %v567
    %v604 = vpack.c.b16 %v570, %v569
    %v605 = vpack.c.b16 %v572, %v571
    %v606 = vpack.c.b16 %v574, %v573
    %v607 = vpack.c.b16 %v576, %v575
    %v608 = vpack.c.b16 %v578, %v577
    %v609 = vpack.c.b16 %v580, %v579
    %v610 = vpack.c.b16 %v582, %v581
    %v611 = vpack.c.b16 %v584, %v583
    %v612 = vpack.c.b16 %v586, %v585
    %v613 = vpack.c.b16 %v588, %v587
    %v614 = vpack.c.b16 %v590, %v589
    %639 = vmatpush.bf16.msra.mxu0 %v598
    %640 = vmatpush.bf16.msra.mxu0 %v597
    %641 = vmatpush.bf16.msra.mxu0 %v596
    %642 = vmatpush.bf16.msra.mxu0 %v595
    %643 = vmatpush.bf16.msra.mxu0 %v594
    %644 = vmatpush.bf16.msra.mxu0 %v593
    %645 = vmatpush.bf16.msra.mxu0 %v592
    %646 = vmatpush.bf16.msra.mxu0 %v591
    %647 = vmatmul.bf16.gmra.mxu0 %v440
    %v648 = vpop.f32.mrf.mxu0
    %v649 = vadd.f32 %v493, %v648
    %v650 = vpop.f32.mrf.mxu0
    %v651 = vadd.f32 %v493, %v650
    %652 = vdwg.mxu0
    %653 = vmatpush.bf16.msra.mxu0 %v606
    %654 = vmatpush.bf16.msra.mxu0 %v605
    %655 = vmatpush.bf16.msra.mxu0 %v604
    %656 = vmatpush.bf16.msra.mxu0 %v603
    %657 = vmatpush.bf16.msra.mxu0 %v602
    %658 = vmatpush.bf16.msra.mxu0 %v601
    %659 = vmatpush.bf16.msra.mxu0 %v600
    %660 = vmatpush.bf16.msra.mxu0 %v599
    %661 = vmatmul.bf16.gmra.mxu0 %v441
    %v662 = vpop.f32.mrf.mxu0
    %v663 = vadd.f32 %v649, %v662
    %v664 = vpop.f32.mrf.mxu0
    %v665 = vadd.f32 %v651, %v664
    %666 = vdwg.mxu0
    %667 = vmatpush.bf16.msra.mxu0 %v614
    %668 = vmatpush.bf16.msra.mxu0 %v613
    %669 = vmatpush.bf16.msra.mxu0 %v612
    %670 = vmatpush.bf16.msra.mxu0 %v611
    %671 = vmatpush.bf16.msra.mxu0 %v610
    %672 = vmatpush.bf16.msra.mxu0 %v609
    %673 = vmatpush.bf16.msra.mxu0 %v608
    %674 = vmatpush.bf16.msra.mxu0 %v607
    %675 = vmatmul.bf16.gmra.mxu0 %v442
    %v676 = vpop.f32.mrf.mxu0
    %v677 = vadd.f32 %v663, %v676
    %v678 = vpop.f32.mrf.mxu0
    %v679 = vadd.f32 %v665, %v678
    %680 = vdwg.mxu0
    %v681 = vmax.f32 %v677, 0.0
    %v682 = vmax.f32 %v679, 0.0
    %vm683 = vcmask 654336
    %684 = vst.msk [vmem:[#allocation5] sm:$0xff] %vm683, %v681
    %685 = vst.msk [vmem:[#allocation5 + $0x8] sm:$0xff] %vm683, %v682
    %v686 = vld [vmem:[#allocation5] ss:$8 sm:$0x3]
    %v687 = vpack.c.bf16 %v686, %v686
    %v688 = vld [vmem:[%s5] sm:$0xf]
    %v689 = vld [vmem:[%s5 + $0x4] sm:$0xf]
    %v690 = vld [vmem:[%s5 + $0x8] sm:$0xf]
    %v691 = vld [vmem:[%s5 + $0xc] sm:$0xf]
    %v692 = vld [vmem:[%s5 + $0x10] sm:$0xf]
    %v693 = vld [vmem:[%s5 + $0x14] sm:$0xf]
    %v694 = vld [vmem:[%s5 + $0x18] sm:$0xf]
    %v695 = vld [vmem:[%s5 + $0x1c] sm:$0xf]
    %v696 = vld [vmem:[%s5 + $0x20] sm:$0xf]
    %v697 = vld [vmem:[%s5 + $0x24] sm:$0xf]
    %s698 = scalar_lea.vmem [#allocation5], 1
    %v699 = vld [vmem:[%s698] ss:$8 sm:$0x3]
    %v700 = vpack.c.bf16 %v699, %v699
    %v701 = vld [vmem:[%s5 + $0x28] sm:$0xf]
    %v702 = vld [vmem:[%s5 + $0x2c] sm:$0xf]
    %v703 = vld [vmem:[%s5 + $0x30] sm:$0xf]
    %v704 = vld [vmem:[%s5 + $0x34] sm:$0xf]
    %v705 = vld [vmem:[%s5 + $0x38] sm:$0xf]
    %v706 = vld [vmem:[%s5 + $0x3c] sm:$0xf]
    %v707 = vld [vmem:[%s5 + $0x40] sm:$0xf]
    %v708 = vld [vmem:[%s5 + $0x44] sm:$0xf]
    %v709 = vld [vmem:[%s5 + $0x48] sm:$0xf]
    %v710 = vld [vmem:[%s5 + $0x4c] sm:$0xf]
    %v721 = vunpack.c.l.b16 %v701
    %v722 = vunpack.c.l.b16 %v702
    %v723 = vunpack.c.l.b16 %v703
    %v724 = vunpack.c.l.b16 %v704
    %v725 = vunpack.c.l.b16 %v705
    %v726 = vunpack.c.l.b16 %v706
    %v727 = vunpack.c.l.b16 %v707
    %v728 = vunpack.c.l.b16 %v708
    %v729 = vunpack.c.l.b16 %v709
    %v730 = vunpack.c.l.b16 %v710
    %v731 = vpack.c.b16 %v722, %v721
    %v732 = vpack.c.b16 %v724, %v723
    %v733 = vpack.c.b16 %v726, %v725
    %v734 = vpack.c.b16 %v728, %v727
    %v735 = vpack.c.b16 %v730, %v729
    %v742 = vsel %vm683, %v700, 0
    %744 = vmatpush.bf16.msra.mxu0 0
    %745 = vmatpush.bf16.msra.mxu0 0
    %746 = vmatpush.bf16.msra.mxu0 0
    %747 = vmatpush.bf16.msra.mxu0 %v735
    %748 = vmatpush.bf16.msra.mxu0 %v734
    %749 = vmatpush.bf16.msra.mxu0 %v733
    %750 = vmatpush.bf16.msra.mxu0 %v732
    %751 = vmatpush.bf16.msra.mxu0 %v731
    %752 = vmatmul.bf16.gmra.mxu0 %v742
    %v753 = vpop.f32.mrf.mxu0
    %v754 = vadd.f32 0.0, %v753
    %v755 = vpop.f32.mrf.mxu0
    %756 = vdwg.mxu0
    %v767 = vunpack.c.l.b16 %v688
    %v768 = vunpack.c.l.b16 %v689
    %v769 = vunpack.c.l.b16 %v690
    %v770 = vunpack.c.l.b16 %v691
    %v771 = vunpack.c.l.b16 %v692
    %v772 = vunpack.c.l.b16 %v693
    %v773 = vunpack.c.l.b16 %v694
    %v774 = vunpack.c.l.b16 %v695
    %v775 = vunpack.c.l.b16 %v696
    %v776 = vunpack.c.l.b16 %v697
    %v777 = vpack.c.b16 %v768, %v767
    %v778 = vpack.c.b16 %v770, %v769
    %v779 = vpack.c.b16 %v772, %v771
    %v780 = vpack.c.b16 %v774, %v773
    %v781 = vpack.c.b16 %v776, %v775
    %v788 = vsel %vm683, %v687, 0
    %790 = vmatpush.bf16.msra.mxu0 0
    %791 = vmatpush.bf16.msra.mxu0 0
    %792 = vmatpush.bf16.msra.mxu0 0
    %793 = vmatpush.bf16.msra.mxu0 %v781
    %794 = vmatpush.bf16.msra.mxu0 %v780
    %795 = vmatpush.bf16.msra.mxu0 %v779
    %796 = vmatpush.bf16.msra.mxu0 %v778
    %797 = vmatpush.bf16.msra.mxu0 %v777
    %798 = vmatmul.bf16.gmra.mxu0 %v788
    %v799 = vpop.f32.mrf.mxu0
    %v800 = vadd.f32 %v754, %v799
    %v801 = vpop.f32.mrf.mxu0
    %802 = vdwg.mxu0
    %s803 = scalar_lea.vmem [#allocation5], 2
    %v804 = vld [vmem:[%s803] ss:$8 sm:$0x3]
    %v805 = vpack.c.bf16 %v804, %v804
    %v806 = vld [vmem:[%s5 + $0x50] sm:$0xf]
    %v807 = vld [vmem:[%s5 + $0x54] sm:$0xf]
    %v808 = vld [vmem:[%s5 + $0x58] sm:$0xf]
    %v809 = vld [vmem:[%s5 + $0x5c] sm:$0xf]
    %v810 = vld [vmem:[%s5 + $0x60] sm:$0xf]
    %v811 = vld [vmem:[%s5 + $0x64] sm:$0xf]
    %v812 = vld [vmem:[%s5 + $0x68] sm:$0xf]
    %v813 = vld [vmem:[%s5 + $0x6c] sm:$0xf]
    %v814 = vld [vmem:[%s5 + $0x70] sm:$0xf]
    %v815 = vld [vmem:[%s5 + $0x74] sm:$0xf]
    %v826 = vunpack.c.l.b16 %v806
    %v827 = vunpack.c.l.b16 %v807
    %v828 = vunpack.c.l.b16 %v808
    %v829 = vunpack.c.l.b16 %v809
    %v830 = vunpack.c.l.b16 %v810
    %v831 = vunpack.c.l.b16 %v811
    %v832 = vunpack.c.l.b16 %v812
    %v833 = vunpack.c.l.b16 %v813
    %v834 = vunpack.c.l.b16 %v814
    %v835 = vunpack.c.l.b16 %v815
    %v836 = vpack.c.b16 %v827, %v826
    %v837 = vpack.c.b16 %v829, %v828
    %v838 = vpack.c.b16 %v831, %v830
    %v839 = vpack.c.b16 %v833, %v832
    %v840 = vpack.c.b16 %v835, %v834
    %v847 = vsel %vm683, %v805, 0
    %849 = vmatpush.bf16.msra.mxu0 0
    %850 = vmatpush.bf16.msra.mxu0 0
    %851 = vmatpush.bf16.msra.mxu0 0
    %852 = vmatpush.bf16.msra.mxu0 %v840
    %853 = vmatpush.bf16.msra.mxu0 %v839
    %854 = vmatpush.bf16.msra.mxu0 %v838
    %855 = vmatpush.bf16.msra.mxu0 %v837
    %856 = vmatpush.bf16.msra.mxu0 %v836
    %857 = vmatmul.bf16.gmra.mxu0 %v847
    %v858 = vpop.f32.mrf.mxu0
    %v859 = vadd.f32 0.0, %v858
    %v860 = vpop.f32.mrf.mxu0
    %861 = vdwg.mxu0
    %v862 = vadd.f32 %v800, %v859
    %s863 = scalar_lea.vmem [#allocation5], 3
    %v864 = vld [vmem:[%s863] ss:$8 sm:$0x3]
    %v865 = vpack.c.bf16 %v864, %v864
    %v866 = vld [vmem:[%s5 + $0x78] sm:$0xf]
    %v867 = vld [vmem:[%s5 + $0x7c] sm:$0xf]
    %v868 = vld [vmem:[%s5 + $0x80] sm:$0xf]
    %v869 = vld [vmem:[%s5 + $0x84] sm:$0xf]
    %v870 = vld [vmem:[%s5 + $0x88] sm:$0xf]
    %v871 = vld [vmem:[%s5 + $0x8c] sm:$0xf]
    %v872 = vld [vmem:[%s5 + $0x90] sm:$0xf]
    %v873 = vld [vmem:[%s5 + $0x94] sm:$0xf]
    %v874 = vld [vmem:[%s5 + $0x98] sm:$0xf]
    %v875 = vld [vmem:[%s5 + $0x9c] sm:$0xf]
    %v886 = vunpack.c.l.b16 %v866
    %v887 = vunpack.c.l.b16 %v867
    %v888 = vunpack.c.l.b16 %v868
    %v889 = vunpack.c.l.b16 %v869
    %v890 = vunpack.c.l.b16 %v870
    %v891 = vunpack.c.l.b16 %v871
    %v892 = vunpack.c.l.b16 %v872
    %v893 = vunpack.c.l.b16 %v873
    %v894 = vunpack.c.l.b16 %v874
    %v895 = vunpack.c.l.b16 %v875
    %v896 = vpack.c.b16 %v887, %v886
    %v897 = vpack.c.b16 %v889, %v888
    %v898 = vpack.c.b16 %v891, %v890
    %v899 = vpack.c.b16 %v893, %v892
    %v900 = vpack.c.b16 %v895, %v894
    %v907 = vsel %vm683, %v865, 0
    %909 = vmatpush.bf16.msra.mxu0 0
    %910 = vmatpush.bf16.msra.mxu0 0
    %911 = vmatpush.bf16.msra.mxu0 0
    %912 = vmatpush.bf16.msra.mxu0 %v900
    %913 = vmatpush.bf16.msra.mxu0 %v899
    %914 = vmatpush.bf16.msra.mxu0 %v898
    %915 = vmatpush.bf16.msra.mxu0 %v897
    %916 = vmatpush.bf16.msra.mxu0 %v896
    %917 = vmatmul.bf16.gmra.mxu0 %v907
    %v918 = vpop.f32.mrf.mxu0
    %v919 = vadd.f32 0.0, %v918
    %v920 = vpop.f32.mrf.mxu0
    %921 = vdwg.mxu0
    %v922 = vadd.f32 %v862, %v919
    %s923 = scalar_lea.vmem [#allocation5], 4
    %v924 = vld [vmem:[%s923] ss:$8 sm:$0x3]
    %v925 = vpack.c.bf16 %v924, %v924
    %v926 = vld [vmem:[%s5 + $0xa0] sm:$0xf]
    %v927 = vld [vmem:[%s5 + $0xa4] sm:$0xf]
    %v928 = vld [vmem:[%s5 + $0xa8] sm:$0xf]
    %v929 = vld [vmem:[%s5 + $0xac] sm:$0xf]
    %v930 = vld [vmem:[%s5 + $0xb0] sm:$0xf]
    %v931 = vld [vmem:[%s5 + $0xb4] sm:$0xf]
    %v932 = vld [vmem:[%s5 + $0xb8] sm:$0xf]
    %v933 = vld [vmem:[%s5 + $0xbc] sm:$0xf]
    %v934 = vld [vmem:[%s5 + $0xc0] sm:$0xf]
    %v935 = vld [vmem:[%s5 + $0xc4] sm:$0xf]
    %v946 = vunpack.c.l.b16 %v926
    %v947 = vunpack.c.l.b16 %v927
    %v948 = vunpack.c.l.b16 %v928
    %v949 = vunpack.c.l.b16 %v929
    %v950 = vunpack.c.l.b16 %v930
    %v951 = vunpack.c.l.b16 %v931
    %v952 = vunpack.c.l.b16 %v932
    %v953 = vunpack.c.l.b16 %v933
    %v954 = vunpack.c.l.b16 %v934
    %v955 = vunpack.c.l.b16 %v935
    %v956 = vpack.c.b16 %v947, %v946
    %v957 = vpack.c.b16 %v949, %v948
    %v958 = vpack.c.b16 %v951, %v950
    %v959 = vpack.c.b16 %v953, %v952
    %v960 = vpack.c.b16 %v955, %v954
    %v967 = vsel %vm683, %v925, 0
    %969 = vmatpush.bf16.msra.mxu0 0
    %970 = vmatpush.bf16.msra.mxu0 0
    %971 = vmatpush.bf16.msra.mxu0 0
    %972 = vmatpush.bf16.msra.mxu0 %v960
    %973 = vmatpush.bf16.msra.mxu0 %v959
    %974 = vmatpush.bf16.msra.mxu0 %v958
    %975 = vmatpush.bf16.msra.mxu0 %v957
    %976 = vmatpush.bf16.msra.mxu0 %v956
    %977 = vmatmul.bf16.gmra.mxu0 %v967
    %v978 = vpop.f32.mrf.mxu0
    %v979 = vadd.f32 0.0, %v978
    %v980 = vpop.f32.mrf.mxu0
    %981 = vdwg.mxu0
    %v982 = vadd.f32 %v922, %v979
    %v983 = vld [vmem:[%s6] sm:$0x1]
    %v985 = vperm.slane %v983, 0
    %v987 = vadd.f32 %v982, %v985
    %v988 = vmax.f32 %v987, 0.0
    %v989 = vpack.c.bf16 %v988, %v988
    %v990 = vld [vmem:[%s7] sm:$0xf]
    %v991 = vld [vmem:[%s7 + $0x4] sm:$0xf]
    %v992 = vld [vmem:[%s7 + $0x8] sm:$0xf]
    %v993 = vld [vmem:[%s7 + $0xc] sm:$0xf]
    %v994 = vld [vmem:[%s8] sm:$0x1]
    %v996 = vperm.slane %v994, 0
    %v1002 = vunpack.c.l.b16 %v990
    %v1003 = vunpack.c.l.b16 %v991
    %v1004 = vunpack.c.l.b16 %v992
    %v1005 = vunpack.c.l.b16 %v993
    %v1006 = vpack.c.b16 %v1003, %v1002
    %v1007 = vpack.c.b16 %v1005, %v1004
    %vm1010 = vcmask 261120
    %v1012 = vsel %vm1010, %v989, 0
    %1014 = vmatpush.bf16.msra.mxu0 0
    %1015 = vmatpush.bf16.msra.mxu0 0
    %1016 = vmatpush.bf16.msra.mxu0 0
    %1017 = vmatpush.bf16.msra.mxu0 0
    %1018 = vmatpush.bf16.msra.mxu0 0
    %1019 = vmatpush.bf16.msra.mxu0 0
    %1020 = vmatpush.bf16.msra.mxu0 %v1007
    %1021 = vmatpush.bf16.msra.mxu0 %v1006
    %1022 = vmatmul.bf16.gmra.mxu0 %v1012
    %v1023 = vpop.f32.mrf.mxu0
    %v1024 = vadd.f32 %v996, %v1023
    %v1025 = vpop.f32.mrf.mxu0
    %1026 = vdwg.mxu0
    %1027 = vst [vmem:[#allocation9] sm:$0x3] %v1024
    // Predicated region
    $region42: #{forward.1} parent=1 // pred_check
      _
    $region43: #{forward.1} parent=1 // pred_check_branch
      %1029 = sbr.rel (0) target = $region45
    $region44: #{forward.1} parent=1 // pred_region
      %1031 = vsyncadd [#allocation8], 0
      %s1033 = sshll.u32 [#allocation9], 4
      %s1034 = int_to_ptr.vmem [resolvable:$true] %s1033
      %s1035 = sshll.u32 %s9, 4
      %s1036 = int_to_ptr.hbm [resolvable:$true] %s1035
      %1038 = dma.vmem_to_hbm [thread:$0]  %s1034, 32, %s1036, [#allocation8]
    $region45: #{forward.1} parent=1 // pred_fallthru
      _
    // Predicated region
    $region46: #{forward.1} parent=1 // pred_check
      _
    $region47: #{forward.1} parent=1 // pred_check_branch
      %1040 = sbr.rel (0) target = $region49
    $region48: #{forward.1} parent=1 // pred_region
      %1042 = dma.done [#allocation8], 32
    $region49: #{forward.1} parent=1 // pred_fallthru
      _
    %1043 = vsyncpa [#allocation7], 1
    %1044 = vsyncpa [#allocation8], 1

</llo_original>
